<compile_context>
chip_gen: v6e
topology: v6e:2x2x1
jax: 0.10.0
libtpu: 0.0.40
codegen_flags: <defaults>
</compile_context>

<pallas_src>
import jax
import jax.numpy as jnp
from jax.experimental import pallas as pl
from jax.experimental.pallas import tpu as pltpu

G = 9.81
LANES = 128            # lane width of one vreg / weight tile
MAX_ROW_TILE = 512     # cap on states per grid step (64 vregs of f32 output)
NET_DIMS = [(10, 5), (10, 10), (10, 10), (10, 10), (4, 10)]  # (out, in) like nn.Linear


def odefunc_kernel(y_ref, w_ref, o_ref):
    """One (tm, 128) tile of states -> one tile of derivatives.

    y_ref: (tm, 128) f32, columns 0..4 live, rest zero.
    w_ref: (5, 128, 128) f32, w_ref[k][:in, :out] = W_k.T, rest zero.
    """
    y = y_ref[...]                                           # (tm, 128)

    # --- MLP hot path: 5 chained MXU matmuls + tanh on aligned tiles ---------
    # Zero padding is preserved through the chain because tanh(0) == 0.
    h = jnp.tanh(jnp.dot(y, w_ref[0], preferred_element_type=jnp.float32))
    h = jnp.tanh(jnp.dot(h, w_ref[1], preferred_element_type=jnp.float32))
    h = jnp.tanh(jnp.dot(h, w_ref[2], preferred_element_type=jnp.float32))
    h = jnp.tanh(jnp.dot(h, w_ref[3], preferred_element_type=jnp.float32))
    h = jnp.dot(h, w_ref[4], preferred_element_type=jnp.float32)
    # h[:, 0:4] == net(y) per row; h[:, 4:] is exactly 0 (w5 only fills cols 0..3)

    # --- pendulum physics term f[4], vectorized over the batch (sublane) axis
    y0 = y[:, 0:1]
    y1 = y[:, 1:2]
    y2 = y[:, 2:3]
    y3 = y[:, 3:4]
    y4 = y[:, 4:5]
    f4 = y4 * (y0 * y0 + y1 * y1) + G * y1 - (y2 * y2 + y3 * y3)   # (tm, 1)

    # place f4 into column 4 of every row (single lane-iota one-hot select)
    cols = jax.lax.broadcasted_iota(jnp.int32, h.shape, 1)
    o_ref[...] = jnp.where(cols == 4, f4, h)


def pad_weights(weights):
    """Pad nn.Linear weights ONCE into a stacked (5, 128, 128) MXU tile array.

    wstack[k][:in, :out] = W_k.T so that  h @ wstack[k] == h @ W_k.T
    (== nn.Linear with bias=False).  Call a single time outside the ODE loop.
    """
    tiles = []
    for w in weights:
        out_dim, in_dim = w.shape
        wp = (
            jnp.zeros((LANES, LANES), jnp.float32)
            .at[:in_dim, :out_dim]
            .set(jnp.asarray(w, jnp.float32).T)
        )
        tiles.append(wp)
    return jnp.stack(tiles, axis=0)          # (5, 128, 128)


def ode_func_forward_batched(t, y_batch, w_stack):
    """Evaluate ODEFunc.forward for a batch of states in ONE pallas_call.

    y_batch: (B, 5) float32.  w_stack: output of pad_weights, (5, 128, 128).
    Weights are DMA'd once and stay VMEM-resident across the whole grid; the
    grid axis over state tiles is 'parallel' (shards across v7x's 2 cores).
    """
    del t  # unused, matches the PyTorch forward
    y_batch = jnp.asarray(y_batch, jnp.float32)
    B = y_batch.shape[0]

    # Adaptive row tile: smallest multiple of 8 covering B, capped at 512.
    tm = min(MAX_ROW_TILE, ((B + 7) // 8) * 8)
    n_blocks = pl.cdiv(B, tm)
    b_pad = n_blocks * tm
    y_pad = jnp.zeros((b_pad, LANES), jnp.float32).at[:B, :5].set(y_batch)

    out_pad = pl.pallas_call(
        odefunc_kernel,
        out_shape=jax.ShapeDtypeStruct((b_pad, LANES), jnp.float32),
        grid=(n_blocks,),
        in_specs=[
            pl.BlockSpec((tm, LANES), lambda i: (i, 0)),
            pl.BlockSpec((len(NET_DIMS), LANES, LANES), lambda i: (0, 0, 0)),
        ],
        out_specs=pl.BlockSpec((tm, LANES), lambda i: (i, 0)),
        compiler_params=pltpu.CompilerParams(dimension_semantics=("parallel",)),
    )(y_pad, w_stack)

    return out_pad[:B, :5]


def ode_func_forward(t, y, w_stack):
    """Single-state forward, matching the PyTorch ODEFunc.forward signature."""
    return ode_func_forward_batched(t, y[None, :], w_stack)[0]


def reference_forward(t, y, weights):
    """Pure-JAX reference mirroring the PyTorch module."""
    del t
    h = y.astype(jnp.float32)
    for i, w in enumerate(weights):
        h = h @ w.T.astype(jnp.float32)
        if i < len(weights) - 1:
            h = jnp.tanh(h)
    f4 = y[4] * (y[0] ** 2 + y[1] ** 2) + G * y[1] - (y[2] ** 2 + y[3] ** 2)
    return jnp.concatenate([h, jnp.array([f4], jnp.float32)])


if __name__ == "__main__":
    key = jax.random.PRNGKey(0)
    keys = jax.random.split(key, len(NET_DIMS) + 2)

    # deterministic weight init: normal(mean=0, std=0.01), matching nn.init.normal_
    weights = [
        0.01 * jax.random.normal(keys[i], dims, dtype=jnp.float32)
        for i, dims in enumerate(NET_DIMS)
    ]
    # (self.net2 is initialized in the PyTorch module but unused in forward — omitted)

    # Pad + stack weights ONCE (outside any ODE step loop).
    w_stack = pad_weights(weights)

    t = jnp.float32(0.0)

    # --- single-state evaluation (matches the PyTorch forward signature) -----
    y = jax.random.normal(keys[-2], (5,), dtype=jnp.float32)
    f = jax.block_until_ready(ode_func_forward(t, y, w_stack))
    f_ref = reference_forward(t, y, weights)
    assert f.shape == (5,)
    assert jnp.allclose(f, f_ref, atol=1e-5, rtol=1e-5), (f, f_ref)

    # --- batched evaluation: 32 states in one pallas_call (single 32-row tile)
    y_batch = jax.random.normal(keys[-1], (32, 5), dtype=jnp.float32)
    fb = jax.block_until_ready(ode_func_forward_batched(t, y_batch, w_stack))
    fb_ref = jax.vmap(lambda yy: reference_forward(t, yy, weights))(y_batch)
    assert fb.shape == (32, 5)
    assert jnp.allclose(fb, fb_ref, atol=1e-5, rtol=1e-5), (fb, fb_ref)

    print("KERNEL_OK")
</pallas_src>

<mosaic_0001>
module attributes {stable_mosaic.version = 11 : i64} {
  func.func @odefunc_kernel(%arg0: i32, %arg1: memref<8x128xf32, #tpu.memory_space<vmem>>, %arg2: memref<5x128x128xf32, #tpu.memory_space<vmem>>, %arg3: memref<8x128xf32, #tpu.memory_space<vmem>>) attributes {dimension_semantics = [#tpu.dimension_semantics<parallel>], iteration_bounds = array<i64: 1>, scalar_prefetch = 0 : i64, scratch_operands = 0 : i64, tpu.core_type = #tpu.core_type<tc>, window_params = [{transform_indices = @transform_0, window_bounds = array<i64: 8, 128>}, {pipeline_mode = #tpu.pipeline_mode<synchronous>, transform_indices = @transform_1, window_bounds = array<i64: 5, 128, 128>}, {transform_indices = @transform_2, window_bounds = array<i64: 8, 128>}]} {
    %c0 = arith.constant 0 : index
    %c0_0 = arith.constant 0 : index
    %0 = vector.load %arg1[%c0, %c0_0] : memref<8x128xf32, #tpu.memory_space<vmem>>, vector<8x128xf32>
    %c0_1 = arith.constant 0 : index
    %c0_2 = arith.constant 0 : index
    %c0_3 = arith.constant 0 : index
    %1 = vector.load %arg2[%c0_1, %c0_2, %c0_3] : memref<5x128x128xf32, #tpu.memory_space<vmem>>, vector<1x128x128xf32>
    %2 = vector.shape_cast %1 : vector<1x128x128xf32> to vector<128x128xf32>
    %cst = arith.constant dense<0.000000e+00> : vector<8x128xf32>
    %3 = tpu.matmul %0, %2, %cst {dimension_numbers = #tpu.dot_dimension_numbers<[1], [0], [0], [1], [0, 0, 1, 1], [], []>} : vector<8x128xf32>, vector<128x128xf32>, vector<8x128xf32> -> vector<8x128xf32>
    %4 = math.tanh %3 : vector<8x128xf32>
    %c1 = arith.constant 1 : index
    %c0_4 = arith.constant 0 : index
    %c0_5 = arith.constant 0 : index
    %5 = vector.load %arg2[%c1, %c0_4, %c0_5] : memref<5x128x128xf32, #tpu.memory_space<vmem>>, vector<1x128x128xf32>
    %6 = vector.shape_cast %5 : vector<1x128x128xf32> to vector<128x128xf32>
    %cst_6 = arith.constant dense<0.000000e+00> : vector<8x128xf32>
    %7 = tpu.matmul %4, %6, %cst_6 {dimension_numbers = #tpu.dot_dimension_numbers<[1], [0], [0], [1], [0, 0, 1, 1], [], []>} : vector<8x128xf32>, vector<128x128xf32>, vector<8x128xf32> -> vector<8x128xf32>
    %8 = math.tanh %7 : vector<8x128xf32>
    %c2 = arith.constant 2 : index
    %c0_7 = arith.constant 0 : index
    %c0_8 = arith.constant 0 : index
    %9 = vector.load %arg2[%c2, %c0_7, %c0_8] : memref<5x128x128xf32, #tpu.memory_space<vmem>>, vector<1x128x128xf32>
    %10 = vector.shape_cast %9 : vector<1x128x128xf32> to vector<128x128xf32>
    %cst_9 = arith.constant dense<0.000000e+00> : vector<8x128xf32>
    %11 = tpu.matmul %8, %10, %cst_9 {dimension_numbers = #tpu.dot_dimension_numbers<[1], [0], [0], [1], [0, 0, 1, 1], [], []>} : vector<8x128xf32>, vector<128x128xf32>, vector<8x128xf32> -> vector<8x128xf32>
    %12 = math.tanh %11 : vector<8x128xf32>
    %c3 = arith.constant 3 : index
    %c0_10 = arith.constant 0 : index
    %c0_11 = arith.constant 0 : index
    %13 = vector.load %arg2[%c3, %c0_10, %c0_11] : memref<5x128x128xf32, #tpu.memory_space<vmem>>, vector<1x128x128xf32>
    %14 = vector.shape_cast %13 : vector<1x128x128xf32> to vector<128x128xf32>
    %cst_12 = arith.constant dense<0.000000e+00> : vector<8x128xf32>
    %15 = tpu.matmul %12, %14, %cst_12 {dimension_numbers = #tpu.dot_dimension_numbers<[1], [0], [0], [1], [0, 0, 1, 1], [], []>} : vector<8x128xf32>, vector<128x128xf32>, vector<8x128xf32> -> vector<8x128xf32>
    %16 = math.tanh %15 : vector<8x128xf32>
    %c4 = arith.constant 4 : index
    %c0_13 = arith.constant 0 : index
    %c0_14 = arith.constant 0 : index
    %17 = vector.load %arg2[%c4, %c0_13, %c0_14] : memref<5x128x128xf32, #tpu.memory_space<vmem>>, vector<1x128x128xf32>
    %18 = vector.shape_cast %17 : vector<1x128x128xf32> to vector<128x128xf32>
    %cst_15 = arith.constant dense<0.000000e+00> : vector<8x128xf32>
    %19 = tpu.matmul %16, %18, %cst_15 {dimension_numbers = #tpu.dot_dimension_numbers<[1], [0], [0], [1], [0, 0, 1, 1], [], []>} : vector<8x128xf32>, vector<128x128xf32>, vector<8x128xf32> -> vector<8x128xf32>
    %20 = vector.extract_strided_slice %0 {offsets = [0, 0], sizes = [8, 1], strides = [1, 1]} : vector<8x128xf32> to vector<8x1xf32>
    %21 = vector.extract_strided_slice %0 {offsets = [0, 1], sizes = [8, 1], strides = [1, 1]} : vector<8x128xf32> to vector<8x1xf32>
    %22 = vector.extract_strided_slice %0 {offsets = [0, 2], sizes = [8, 1], strides = [1, 1]} : vector<8x128xf32> to vector<8x1xf32>
    %23 = vector.extract_strided_slice %0 {offsets = [0, 3], sizes = [8, 1], strides = [1, 1]} : vector<8x128xf32> to vector<8x1xf32>
    %24 = vector.extract_strided_slice %0 {offsets = [0, 4], sizes = [8, 1], strides = [1, 1]} : vector<8x128xf32> to vector<8x1xf32>
    %25 = arith.mulf %20, %20 : vector<8x1xf32>
    %26 = arith.mulf %21, %21 : vector<8x1xf32>
    %27 = arith.addf %25, %26 : vector<8x1xf32>
    %28 = arith.mulf %24, %27 : vector<8x1xf32>
    %cst_16 = arith.constant 9.810000e+00 : f32
    %29 = vector.broadcast %cst_16 : f32 to vector<8x1xf32>
    %30 = arith.mulf %29, %21 : vector<8x1xf32>
    %31 = arith.addf %28, %30 : vector<8x1xf32>
    %32 = arith.mulf %22, %22 : vector<8x1xf32>
    %33 = arith.mulf %23, %23 : vector<8x1xf32>
    %34 = arith.addf %32, %33 : vector<8x1xf32>
    %35 = arith.subf %31, %34 : vector<8x1xf32>
    %36 = tpu.iota {dimensions = array<i32: 1>} : vector<8x128xi32>
    %c4_i32 = arith.constant 4 : i32
    %37 = vector.broadcast %c4_i32 : i32 to vector<8x128xi32>
    %38 = arith.cmpi eq, %36, %37 : vector<8x128xi32>
    %39 = vector.shape_cast %35 : vector<8x1xf32> to vector<8x1xf32>
    %40 = vector.broadcast %39 : vector<8x1xf32> to vector<8x128xf32>
    %41 = arith.select %38, %40, %19 : vector<8x128xi1>, vector<8x128xf32>
    %c0_17 = arith.constant 0 : index
    %c0_18 = arith.constant 0 : index
    %42 = vector.load %arg3[%c0_17, %c0_18] : memref<8x128xf32, #tpu.memory_space<vmem>>, vector<8x128xf32>
    tpu.vector_store %arg3[%c0_17, %c0_18], %41 {strides = array<i32>} : memref<8x128xf32, #tpu.memory_space<vmem>>, vector<8x128xf32>,
    return
  }
  func.func @transform_0(%arg0: i32) -> (i32, i32) {
    %c0_i32 = arith.constant 0 : i32
    %c0_i32_0 = arith.constant 0 : i32
    return %arg0, %c0_i32 : i32, i32
  }
  func.func @transform_1(%arg0: i32) -> (i32, i32, i32) {
    %c0_i32 = arith.constant 0 : i32
    %c0_i32_0 = arith.constant 0 : i32
    %c0_i32_1 = arith.constant 0 : i32
    %c0_i32_2 = arith.constant 0 : i32
    return %c0_i32, %c0_i32_0, %c0_i32_1 : i32, i32, i32
  }
  func.func @transform_2(%arg0: i32) -> (i32, i32) {
    %c0_i32 = arith.constant 0 : i32
    %c0_i32_0 = arith.constant 0 : i32
    return %arg0, %c0_i32 : i32, i32
  }
}

</mosaic_0001>

<llo_original>
// kernel: tpu_custom_call.1
$region0: #{tpu_custom_call.1}
  #allocation0 [shape = 'u32[]', space=smem, size = 0x4, offset = 0x4, fixed_abs, tag = 'smem constant byte address 0x4 - core index']
  #allocation1 [shape = 'u32[144,128]{1,0:T(1,128)}', space=vmem, size = 0x12000, scoped, tag = 'internal scratch']
  %s0 = inlined_call_operand.hbm [shape: f32[8,128], index: 0, kind: input, shape index: {}]
  %s1 = inlined_call_operand.hbm [shape: f32[5,128,128], index: 1, kind: input, shape index: {}]
  %s2 = inlined_call_operand.hbm [shape: f32[8,128], index: 2, kind: output, shape index: {}]
  %s3 = sld [smem:[#allocation0]]
  $region26: #{tpu_custom_call.1} parent=0
    _
  %s5 = ssub.s32 1, %s3
  %s6 = scalar_select 0, %s5, %s3
  $region1: #{tpu_custom_call.1} parent=0
    #allocation2 [shape = 'u8[4096]{0}', space=vmem, size = 0x1000, scoped, tag = 'input window, operand 0, single buffered']
    #allocation3 [shape = 's32[1]{0}', space=sflag, size = 0x4, scoped, tag = 'scoped memory for tpu_custom_call.1']
    #allocation4 [shape = 's32[1]{0}', space=sflag, size = 0x4, scoped, tag = 'scoped memory for tpu_custom_call.1']
    #allocation5 [shape = 'u8[327680]{0}', space=vmem, size = 0x50000, scoped, tag = 'input window, operand 1, single buffered']
    #allocation6 [shape = 's32[1]{0}', space=sflag, size = 0x4, scoped, tag = 'scoped memory for tpu_custom_call.1']
    #allocation7 [shape = 'u8[4096]{0}', space=vmem, size = 0x1000, scoped, tag = 'output window, operand 0, single buffered']
    %7 = vsyncpa [#allocation3], 0
    %8 = vsyncpa [#allocation6], 0
    %9 = vsyncpa [#allocation4], 0
    // Predicated region
    $region2: #{tpu_custom_call.1} parent=1 // pred_check
      _
    $region3: #{tpu_custom_call.1} parent=1 // pred_check_branch
      %11 = sbr.rel (0) target = $region5
    $region4: #{tpu_custom_call.1} parent=1 // pred_region
      %s13 = ssub.s32 128, 128
      %14 = vsyncadd [#allocation3], %s13
      %s16 = sshll.u32 [#allocation2], 4
      %s17 = int_to_ptr.vmem [resolvable:$true] %s16
      %19 = dma.hbm_to_vmem [thread:$0]  %s0, 128, %s17, [#allocation3]
    $region5: #{tpu_custom_call.1} parent=1 // pred_fallthru
      _
    // Predicated region
    $region6: #{tpu_custom_call.1} parent=1 // pred_check
      _
    $region7: #{tpu_custom_call.1} parent=1 // pred_check_branch
      %21 = sbr.rel (0) target = $region9
    $region8: #{tpu_custom_call.1} parent=1 // pred_region
      %s23 = ssub.s32 10240, 10240
      %24 = vsyncadd [#allocation6], %s23
      %s25 = sshll.u32 [#allocation5], 4
      %s26 = int_to_ptr.vmem [resolvable:$true] %s25
      %31 = dma.hbm_to_vmem [thread:$0]  %s1, 10240, %s26, [#allocation6], 128, 128, 8
    $region9: #{tpu_custom_call.1} parent=1 // pred_fallthru
      _
    // Predicated region
    $region10: #{tpu_custom_call.1} parent=1 // pred_check
      _
    $region11: #{tpu_custom_call.1} parent=1 // pred_check_branch
      %33 = sbr.rel (0) target = $region13
    $region12: #{tpu_custom_call.1} parent=1 // pred_region
      %34 = dma.done [#allocation3], 128
    $region13: #{tpu_custom_call.1} parent=1 // pred_fallthru
      _
    // Predicated region
    $region14: #{tpu_custom_call.1} parent=1 // pred_check
      _
    $region15: #{tpu_custom_call.1} parent=1 // pred_check_branch
      %36 = sbr.rel (0) target = $region17
    $region16: #{tpu_custom_call.1} parent=1 // pred_region
      %37 = dma.done [#allocation6], 10240
    $region17: #{tpu_custom_call.1} parent=1 // pred_fallthru
      _
    %v38 = vld [vmem:[#allocation2] sm:$0xff]
    %v39 = vld [vmem:[#allocation5] sm:$0xff]
    %v40 = vld [vmem:[#allocation5 + $0x8] sm:$0xff]
    %v41 = vld [vmem:[#allocation5 + $0x10] sm:$0xff]
    %v42 = vld [vmem:[#allocation5 + $0x18] sm:$0xff]
    %v43 = vld [vmem:[#allocation5 + $0x20] sm:$0xff]
    %v44 = vld [vmem:[#allocation5 + $0x28] sm:$0xff]
    %v45 = vld [vmem:[#allocation5 + $0x30] sm:$0xff]
    %v46 = vld [vmem:[#allocation5 + $0x38] sm:$0xff]
    %v47 = vld [vmem:[#allocation5 + $0x40] sm:$0xff]
    %v48 = vld [vmem:[#allocation5 + $0x48] sm:$0xff]
    %v49 = vld [vmem:[#allocation5 + $0x50] sm:$0xff]
    %v50 = vld [vmem:[#allocation5 + $0x58] sm:$0xff]
    %v51 = vld [vmem:[#allocation5 + $0x60] sm:$0xff]
    %v52 = vld [vmem:[#allocation5 + $0x68] sm:$0xff]
    %v53 = vld [vmem:[#allocation5 + $0x70] sm:$0xff]
    %v54 = vld [vmem:[#allocation5 + $0x78] sm:$0xff]
    %55 = vmatprep.subr.mxu0 0.0
    %56 = vmatpush1.msra.mxu0 %v54
    %57 = vmatprep.subr.mxu0 0.0
    %58 = vmatpush1.msra.mxu0 %v53
    %59 = vmatprep.subr.mxu0 0.0
    %60 = vmatpush1.msra.mxu0 %v52
    %61 = vmatprep.subr.mxu0 0.0
    %62 = vmatpush1.msra.mxu0 %v51
    %63 = vmatprep.subr.mxu0 0.0
    %64 = vmatpush1.msra.mxu0 %v50
    %65 = vmatprep.subr.mxu0 0.0
    %66 = vmatpush1.msra.mxu0 %v49
    %67 = vmatprep.subr.mxu0 0.0
    %68 = vmatpush1.msra.mxu0 %v48
    %69 = vmatprep.subr.mxu0 0.0
    %70 = vmatpush1.msra.mxu0 %v47
    %71 = vmatprep.subr.mxu0 0.0
    %72 = vmatpush1.msra.mxu0 %v46
    %73 = vmatprep.subr.mxu0 0.0
    %74 = vmatpush1.msra.mxu0 %v45
    %75 = vmatprep.subr.mxu0 0.0
    %76 = vmatpush1.msra.mxu0 %v44
    %77 = vmatprep.subr.mxu0 0.0
    %78 = vmatpush1.msra.mxu0 %v43
    %79 = vmatprep.subr.mxu0 0.0
    %80 = vmatpush1.msra.mxu0 %v42
    %81 = vmatprep.subr.mxu0 0.0
    %82 = vmatpush1.msra.mxu0 %v41
    %83 = vmatprep.subr.mxu0 0.0
    %84 = vmatpush1.msra.mxu0 %v40
    %85 = vmatprep.subr.mxu0 0.0
    %86 = vmatpush1.msra.mxu0 %v39
    %87 = vmatprep.subr.mxu0 0.0
    %88 = vmatpush2.msra.mxu0 0.0
    %89 = vmatprep.subr.mxu0 0.0
    %90 = vmatpush2.msra.mxu0 0.0
    %91 = vmatprep.subr.mxu0 0.0
    %92 = vmatpush2.msra.mxu0 0.0
    %93 = vmatprep.subr.mxu0 0.0
    %94 = vmatpush2.msra.mxu0 0.0
    %95 = vmatprep.subr.mxu0 0.0
    %96 = vmatpush2.msra.mxu0 0.0
    %97 = vmatprep.subr.mxu0 0.0
    %98 = vmatpush2.msra.mxu0 0.0
    %99 = vmatprep.subr.mxu0 0.0
    %100 = vmatpush2.msra.mxu0 0.0
    %101 = vmatprep.subr.mxu0 0.0
    %102 = vmatpush2.msra.mxu0 0.0
    %103 = vmatprep.subr.mxu0 0.0
    %104 = vmatpush2.msra.mxu0 0.0
    %105 = vmatprep.subr.mxu0 0.0
    %106 = vmatpush2.msra.mxu0 0.0
    %107 = vmatprep.subr.mxu0 0.0
    %108 = vmatpush2.msra.mxu0 0.0
    %109 = vmatprep.subr.mxu0 0.0
    %110 = vmatpush2.msra.mxu0 0.0
    %111 = vmatprep.subr.mxu0 0.0
    %112 = vmatpush2.msra.mxu0 0.0
    %113 = vmatprep.subr.mxu0 0.0
    %114 = vmatpush2.msra.mxu0 0.0
    %115 = vmatprep.subr.mxu0 0.0
    %116 = vmatpush2.msra.mxu0 0.0
    %117 = vmatprep.subr.mxu0 0.0
    %118 = vmatpush2.msra.mxu0 0.0
    %119 = vmatprep.mubr.f32.mxu0 0.0
    %120 = vmatmul.mubr.f32.gmra.mxu0 %v38
    %v121 = vpop.f32.mrf.mxu0
    %v122 = vadd.f32 0.0, %v121
    %v123 = vpop.f32.mrf.mxu0
    %124 = vdwg.mxu0
    %v125 = vtanh.pop %v122
    %s126 = scalar_lea.vmem [#allocation5], 128
    %v127 = vld [vmem:[%s126] sm:$0xff]
    %v128 = vld [vmem:[%s126 + $0x8] sm:$0xff]
    %v129 = vld [vmem:[%s126 + $0x10] sm:$0xff]
    %v130 = vld [vmem:[%s126 + $0x18] sm:$0xff]
    %v131 = vld [vmem:[%s126 + $0x20] sm:$0xff]
    %v132 = vld [vmem:[%s126 + $0x28] sm:$0xff]
    %v133 = vld [vmem:[%s126 + $0x30] sm:$0xff]
    %v134 = vld [vmem:[%s126 + $0x38] sm:$0xff]
    %v135 = vld [vmem:[%s126 + $0x40] sm:$0xff]
    %v136 = vld [vmem:[%s126 + $0x48] sm:$0xff]
    %v137 = vld [vmem:[%s126 + $0x50] sm:$0xff]
    %v138 = vld [vmem:[%s126 + $0x58] sm:$0xff]
    %v139 = vld [vmem:[%s126 + $0x60] sm:$0xff]
    %v140 = vld [vmem:[%s126 + $0x68] sm:$0xff]
    %v141 = vld [vmem:[%s126 + $0x70] sm:$0xff]
    %v142 = vld [vmem:[%s126 + $0x78] sm:$0xff]
    %143 = vmatprep.subr.mxu0 0.0
    %144 = vmatpush1.msra.mxu0 %v142
    %145 = vmatprep.subr.mxu0 0.0
    %146 = vmatpush1.msra.mxu0 %v141
    %147 = vmatprep.subr.mxu0 0.0
    %148 = vmatpush1.msra.mxu0 %v140
    %149 = vmatprep.subr.mxu0 0.0
    %150 = vmatpush1.msra.mxu0 %v139
    %151 = vmatprep.subr.mxu0 0.0
    %152 = vmatpush1.msra.mxu0 %v138
    %153 = vmatprep.subr.mxu0 0.0
    %154 = vmatpush1.msra.mxu0 %v137
    %155 = vmatprep.subr.mxu0 0.0
    %156 = vmatpush1.msra.mxu0 %v136
    %157 = vmatprep.subr.mxu0 0.0
    %158 = vmatpush1.msra.mxu0 %v135
    %159 = vmatprep.subr.mxu0 0.0
    %160 = vmatpush1.msra.mxu0 %v134
    %161 = vmatprep.subr.mxu0 0.0
    %162 = vmatpush1.msra.mxu0 %v133
    %163 = vmatprep.subr.mxu0 0.0
    %164 = vmatpush1.msra.mxu0 %v132
    %165 = vmatprep.subr.mxu0 0.0
    %166 = vmatpush1.msra.mxu0 %v131
    %167 = vmatprep.subr.mxu0 0.0
    %168 = vmatpush1.msra.mxu0 %v130
    %169 = vmatprep.subr.mxu0 0.0
    %170 = vmatpush1.msra.mxu0 %v129
    %171 = vmatprep.subr.mxu0 0.0
    %172 = vmatpush1.msra.mxu0 %v128
    %173 = vmatprep.subr.mxu0 0.0
    %174 = vmatpush1.msra.mxu0 %v127
    %175 = vmatprep.subr.mxu0 0.0
    %176 = vmatpush2.msra.mxu0 0.0
    %177 = vmatprep.subr.mxu0 0.0
    %178 = vmatpush2.msra.mxu0 0.0
    %179 = vmatprep.subr.mxu0 0.0
    %180 = vmatpush2.msra.mxu0 0.0
    %181 = vmatprep.subr.mxu0 0.0
    %182 = vmatpush2.msra.mxu0 0.0
    %183 = vmatprep.subr.mxu0 0.0
    %184 = vmatpush2.msra.mxu0 0.0
    %185 = vmatprep.subr.mxu0 0.0
    %186 = vmatpush2.msra.mxu0 0.0
    %187 = vmatprep.subr.mxu0 0.0
    %188 = vmatpush2.msra.mxu0 0.0
    %189 = vmatprep.subr.mxu0 0.0
    %190 = vmatpush2.msra.mxu0 0.0
    %191 = vmatprep.subr.mxu0 0.0
    %192 = vmatpush2.msra.mxu0 0.0
    %193 = vmatprep.subr.mxu0 0.0
    %194 = vmatpush2.msra.mxu0 0.0
    %195 = vmatprep.subr.mxu0 0.0
    %196 = vmatpush2.msra.mxu0 0.0
    %197 = vmatprep.subr.mxu0 0.0
    %198 = vmatpush2.msra.mxu0 0.0
    %199 = vmatprep.subr.mxu0 0.0
    %200 = vmatpush2.msra.mxu0 0.0
    %201 = vmatprep.subr.mxu0 0.0
    %202 = vmatpush2.msra.mxu0 0.0
    %203 = vmatprep.subr.mxu0 0.0
    %204 = vmatpush2.msra.mxu0 0.0
    %205 = vmatprep.subr.mxu0 0.0
    %206 = vmatpush2.msra.mxu0 0.0
    %207 = vmatprep.mubr.f32.mxu0 0.0
    %208 = vmatmul.mubr.f32.gmra.mxu0 %v125
    %v209 = vpop.f32.mrf.mxu0
    %v210 = vadd.f32 0.0, %v209
    %v211 = vpop.f32.mrf.mxu0
    %212 = vdwg.mxu0
    %v213 = vtanh.pop %v210
    %s214 = scalar_lea.vmem [#allocation5], 256
    %v215 = vld [vmem:[%s214] sm:$0xff]
    %v216 = vld [vmem:[%s214 + $0x8] sm:$0xff]
    %v217 = vld [vmem:[%s214 + $0x10] sm:$0xff]
    %v218 = vld [vmem:[%s214 + $0x18] sm:$0xff]
    %v219 = vld [vmem:[%s214 + $0x20] sm:$0xff]
    %v220 = vld [vmem:[%s214 + $0x28] sm:$0xff]
    %v221 = vld [vmem:[%s214 + $0x30] sm:$0xff]
    %v222 = vld [vmem:[%s214 + $0x38] sm:$0xff]
    %v223 = vld [vmem:[%s214 + $0x40] sm:$0xff]
    %v224 = vld [vmem:[%s214 + $0x48] sm:$0xff]
    %v225 = vld [vmem:[%s214 + $0x50] sm:$0xff]
    %v226 = vld [vmem:[%s214 + $0x58] sm:$0xff]
    %v227 = vld [vmem:[%s214 + $0x60] sm:$0xff]
    %v228 = vld [vmem:[%s214 + $0x68] sm:$0xff]
    %v229 = vld [vmem:[%s214 + $0x70] sm:$0xff]
    %v230 = vld [vmem:[%s214 + $0x78] sm:$0xff]
    %231 = vmatprep.subr.mxu0 0.0
    %232 = vmatpush1.msra.mxu0 %v230
    %233 = vmatprep.subr.mxu0 0.0
    %234 = vmatpush1.msra.mxu0 %v229
    %235 = vmatprep.subr.mxu0 0.0
    %236 = vmatpush1.msra.mxu0 %v228
    %237 = vmatprep.subr.mxu0 0.0
    %238 = vmatpush1.msra.mxu0 %v227
    %239 = vmatprep.subr.mxu0 0.0
    %240 = vmatpush1.msra.mxu0 %v226
    %241 = vmatprep.subr.mxu0 0.0
    %242 = vmatpush1.msra.mxu0 %v225
    %243 = vmatprep.subr.mxu0 0.0
    %244 = vmatpush1.msra.mxu0 %v224
    %245 = vmatprep.subr.mxu0 0.0
    %246 = vmatpush1.msra.mxu0 %v223
    %247 = vmatprep.subr.mxu0 0.0
    %248 = vmatpush1.msra.mxu0 %v222
    %249 = vmatprep.subr.mxu0 0.0
    %250 = vmatpush1.msra.mxu0 %v221
    %251 = vmatprep.subr.mxu0 0.0
    %252 = vmatpush1.msra.mxu0 %v220
    %253 = vmatprep.subr.mxu0 0.0
    %254 = vmatpush1.msra.mxu0 %v219
    %255 = vmatprep.subr.mxu0 0.0
    %256 = vmatpush1.msra.mxu0 %v218
    %257 = vmatprep.subr.mxu0 0.0
    %258 = vmatpush1.msra.mxu0 %v217
    %259 = vmatprep.subr.mxu0 0.0
    %260 = vmatpush1.msra.mxu0 %v216
    %261 = vmatprep.subr.mxu0 0.0
    %262 = vmatpush1.msra.mxu0 %v215
    %263 = vmatprep.subr.mxu0 0.0
    %264 = vmatpush2.msra.mxu0 0.0
    %265 = vmatprep.subr.mxu0 0.0
    %266 = vmatpush2.msra.mxu0 0.0
    %267 = vmatprep.subr.mxu0 0.0
    %268 = vmatpush2.msra.mxu0 0.0
    %269 = vmatprep.subr.mxu0 0.0
    %270 = vmatpush2.msra.mxu0 0.0
    %271 = vmatprep.subr.mxu0 0.0
    %272 = vmatpush2.msra.mxu0 0.0
    %273 = vmatprep.subr.mxu0 0.0
    %274 = vmatpush2.msra.mxu0 0.0
    %275 = vmatprep.subr.mxu0 0.0
    %276 = vmatpush2.msra.mxu0 0.0
    %277 = vmatprep.subr.mxu0 0.0
    %278 = vmatpush2.msra.mxu0 0.0
    %279 = vmatprep.subr.mxu0 0.0
    %280 = vmatpush2.msra.mxu0 0.0
    %281 = vmatprep.subr.mxu0 0.0
    %282 = vmatpush2.msra.mxu0 0.0
    %283 = vmatprep.subr.mxu0 0.0
    %284 = vmatpush2.msra.mxu0 0.0
    %285 = vmatprep.subr.mxu0 0.0
    %286 = vmatpush2.msra.mxu0 0.0
    %287 = vmatprep.subr.mxu0 0.0
    %288 = vmatpush2.msra.mxu0 0.0
    %289 = vmatprep.subr.mxu0 0.0
    %290 = vmatpush2.msra.mxu0 0.0
    %291 = vmatprep.subr.mxu0 0.0
    %292 = vmatpush2.msra.mxu0 0.0
    %293 = vmatprep.subr.mxu0 0.0
    %294 = vmatpush2.msra.mxu0 0.0
    %295 = vmatprep.mubr.f32.mxu0 0.0
    %296 = vmatmul.mubr.f32.gmra.mxu0 %v213
    %v297 = vpop.f32.mrf.mxu0
    %v298 = vadd.f32 0.0, %v297
    %v299 = vpop.f32.mrf.mxu0
    %300 = vdwg.mxu0
    %v301 = vtanh.pop %v298
    %s302 = scalar_lea.vmem [#allocation5], 384
    %v303 = vld [vmem:[%s302] sm:$0xff]
    %v304 = vld [vmem:[%s302 + $0x8] sm:$0xff]
    %v305 = vld [vmem:[%s302 + $0x10] sm:$0xff]
    %v306 = vld [vmem:[%s302 + $0x18] sm:$0xff]
    %v307 = vld [vmem:[%s302 + $0x20] sm:$0xff]
    %v308 = vld [vmem:[%s302 + $0x28] sm:$0xff]
    %v309 = vld [vmem:[%s302 + $0x30] sm:$0xff]
    %v310 = vld [vmem:[%s302 + $0x38] sm:$0xff]
    %v311 = vld [vmem:[%s302 + $0x40] sm:$0xff]
    %v312 = vld [vmem:[%s302 + $0x48] sm:$0xff]
    %v313 = vld [vmem:[%s302 + $0x50] sm:$0xff]
    %v314 = vld [vmem:[%s302 + $0x58] sm:$0xff]
    %v315 = vld [vmem:[%s302 + $0x60] sm:$0xff]
    %v316 = vld [vmem:[%s302 + $0x68] sm:$0xff]
    %v317 = vld [vmem:[%s302 + $0x70] sm:$0xff]
    %v318 = vld [vmem:[%s302 + $0x78] sm:$0xff]
    %319 = vmatprep.subr.mxu0 0.0
    %320 = vmatpush1.msra.mxu0 %v318
    %321 = vmatprep.subr.mxu0 0.0
    %322 = vmatpush1.msra.mxu0 %v317
    %323 = vmatprep.subr.mxu0 0.0
    %324 = vmatpush1.msra.mxu0 %v316
    %325 = vmatprep.subr.mxu0 0.0
    %326 = vmatpush1.msra.mxu0 %v315
    %327 = vmatprep.subr.mxu0 0.0
    %328 = vmatpush1.msra.mxu0 %v314
    %329 = vmatprep.subr.mxu0 0.0
    %330 = vmatpush1.msra.mxu0 %v313
    %331 = vmatprep.subr.mxu0 0.0
    %332 = vmatpush1.msra.mxu0 %v312
    %333 = vmatprep.subr.mxu0 0.0
    %334 = vmatpush1.msra.mxu0 %v311
    %335 = vmatprep.subr.mxu0 0.0
    %336 = vmatpush1.msra.mxu0 %v310
    %337 = vmatprep.subr.mxu0 0.0
    %338 = vmatpush1.msra.mxu0 %v309
    %339 = vmatprep.subr.mxu0 0.0
    %340 = vmatpush1.msra.mxu0 %v308
    %341 = vmatprep.subr.mxu0 0.0
    %342 = vmatpush1.msra.mxu0 %v307
    %343 = vmatprep.subr.mxu0 0.0
    %344 = vmatpush1.msra.mxu0 %v306
    %345 = vmatprep.subr.mxu0 0.0
    %346 = vmatpush1.msra.mxu0 %v305
    %347 = vmatprep.subr.mxu0 0.0
    %348 = vmatpush1.msra.mxu0 %v304
    %349 = vmatprep.subr.mxu0 0.0
    %350 = vmatpush1.msra.mxu0 %v303
    %351 = vmatprep.subr.mxu0 0.0
    %352 = vmatpush2.msra.mxu0 0.0
    %353 = vmatprep.subr.mxu0 0.0
    %354 = vmatpush2.msra.mxu0 0.0
    %355 = vmatprep.subr.mxu0 0.0
    %356 = vmatpush2.msra.mxu0 0.0
    %357 = vmatprep.subr.mxu0 0.0
    %358 = vmatpush2.msra.mxu0 0.0
    %359 = vmatprep.subr.mxu0 0.0
    %360 = vmatpush2.msra.mxu0 0.0
    %361 = vmatprep.subr.mxu0 0.0
    %362 = vmatpush2.msra.mxu0 0.0
    %363 = vmatprep.subr.mxu0 0.0
    %364 = vmatpush2.msra.mxu0 0.0
    %365 = vmatprep.subr.mxu0 0.0
    %366 = vmatpush2.msra.mxu0 0.0
    %367 = vmatprep.subr.mxu0 0.0
    %368 = vmatpush2.msra.mxu0 0.0
    %369 = vmatprep.subr.mxu0 0.0
    %370 = vmatpush2.msra.mxu0 0.0
    %371 = vmatprep.subr.mxu0 0.0
    %372 = vmatpush2.msra.mxu0 0.0
    %373 = vmatprep.subr.mxu0 0.0
    %374 = vmatpush2.msra.mxu0 0.0
    %375 = vmatprep.subr.mxu0 0.0
    %376 = vmatpush2.msra.mxu0 0.0
    %377 = vmatprep.subr.mxu0 0.0
    %378 = vmatpush2.msra.mxu0 0.0
    %379 = vmatprep.subr.mxu0 0.0
    %380 = vmatpush2.msra.mxu0 0.0
    %381 = vmatprep.subr.mxu0 0.0
    %382 = vmatpush2.msra.mxu0 0.0
    %383 = vmatprep.mubr.f32.mxu0 0.0
    %384 = vmatmul.mubr.f32.gmra.mxu0 %v301
    %v385 = vpop.f32.mrf.mxu0
    %v386 = vadd.f32 0.0, %v385
    %v387 = vpop.f32.mrf.mxu0
    %388 = vdwg.mxu0
    %v389 = vtanh.pop %v386
    %s390 = scalar_lea.vmem [#allocation5], 512
    %v391 = vld [vmem:[%s390] sm:$0xff]
    %v392 = vld [vmem:[%s390 + $0x8] sm:$0xff]
    %v393 = vld [vmem:[%s390 + $0x10] sm:$0xff]
    %v394 = vld [vmem:[%s390 + $0x18] sm:$0xff]
    %v395 = vld [vmem:[%s390 + $0x20] sm:$0xff]
    %v396 = vld [vmem:[%s390 + $0x28] sm:$0xff]
    %v397 = vld [vmem:[%s390 + $0x30] sm:$0xff]
    %v398 = vld [vmem:[%s390 + $0x38] sm:$0xff]
    %v399 = vld [vmem:[%s390 + $0x40] sm:$0xff]
    %v400 = vld [vmem:[%s390 + $0x48] sm:$0xff]
    %v401 = vld [vmem:[%s390 + $0x50] sm:$0xff]
    %v402 = vld [vmem:[%s390 + $0x58] sm:$0xff]
    %v403 = vld [vmem:[%s390 + $0x60] sm:$0xff]
    %v404 = vld [vmem:[%s390 + $0x68] sm:$0xff]
    %v405 = vld [vmem:[%s390 + $0x70] sm:$0xff]
    %v406 = vld [vmem:[%s390 + $0x78] sm:$0xff]
    %407 = vmatprep.subr.mxu0 0.0
    %408 = vmatpush1.msra.mxu0 %v406
    %409 = vmatprep.subr.mxu0 0.0
    %410 = vmatpush1.msra.mxu0 %v405
    %411 = vmatprep.subr.mxu0 0.0
    %412 = vmatpush1.msra.mxu0 %v404
    %413 = vmatprep.subr.mxu0 0.0
    %414 = vmatpush1.msra.mxu0 %v403
    %415 = vmatprep.subr.mxu0 0.0
    %416 = vmatpush1.msra.mxu0 %v402
    %417 = vmatprep.subr.mxu0 0.0
    %418 = vmatpush1.msra.mxu0 %v401
    %419 = vmatprep.subr.mxu0 0.0
    %420 = vmatpush1.msra.mxu0 %v400
    %421 = vmatprep.subr.mxu0 0.0
    %422 = vmatpush1.msra.mxu0 %v399
    %423 = vmatprep.subr.mxu0 0.0
    %424 = vmatpush1.msra.mxu0 %v398
    %425 = vmatprep.subr.mxu0 0.0
    %426 = vmatpush1.msra.mxu0 %v397
    %427 = vmatprep.subr.mxu0 0.0
    %428 = vmatpush1.msra.mxu0 %v396
    %429 = vmatprep.subr.mxu0 0.0
    %430 = vmatpush1.msra.mxu0 %v395
    %431 = vmatprep.subr.mxu0 0.0
    %432 = vmatpush1.msra.mxu0 %v394
    %433 = vmatprep.subr.mxu0 0.0
    %434 = vmatpush1.msra.mxu0 %v393
    %435 = vmatprep.subr.mxu0 0.0
    %436 = vmatpush1.msra.mxu0 %v392
    %437 = vmatprep.subr.mxu0 0.0
    %438 = vmatpush1.msra.mxu0 %v391
    %439 = vmatprep.subr.mxu0 0.0
    %440 = vmatpush2.msra.mxu0 0.0
    %441 = vmatprep.subr.mxu0 0.0
    %442 = vmatpush2.msra.mxu0 0.0
    %443 = vmatprep.subr.mxu0 0.0
    %444 = vmatpush2.msra.mxu0 0.0
    %445 = vmatprep.subr.mxu0 0.0
    %446 = vmatpush2.msra.mxu0 0.0
    %447 = vmatprep.subr.mxu0 0.0
    %448 = vmatpush2.msra.mxu0 0.0
    %449 = vmatprep.subr.mxu0 0.0
    %450 = vmatpush2.msra.mxu0 0.0
    %451 = vmatprep.subr.mxu0 0.0
    %452 = vmatpush2.msra.mxu0 0.0
    %453 = vmatprep.subr.mxu0 0.0
    %454 = vmatpush2.msra.mxu0 0.0
    %455 = vmatprep.subr.mxu0 0.0
    %456 = vmatpush2.msra.mxu0 0.0
    %457 = vmatprep.subr.mxu0 0.0
    %458 = vmatpush2.msra.mxu0 0.0
    %459 = vmatprep.subr.mxu0 0.0
    %460 = vmatpush2.msra.mxu0 0.0
    %461 = vmatprep.subr.mxu0 0.0
    %462 = vmatpush2.msra.mxu0 0.0
    %463 = vmatprep.subr.mxu0 0.0
    %464 = vmatpush2.msra.mxu0 0.0
    %465 = vmatprep.subr.mxu0 0.0
    %466 = vmatpush2.msra.mxu0 0.0
    %467 = vmatprep.subr.mxu0 0.0
    %468 = vmatpush2.msra.mxu0 0.0
    %469 = vmatprep.subr.mxu0 0.0
    %470 = vmatpush2.msra.mxu0 0.0
    %471 = vmatprep.mubr.f32.mxu0 0.0
    %472 = vmatmul.mubr.f32.gmra.mxu0 %v389
    %v473 = vpop.f32.mrf.mxu0
    %v474 = vadd.f32 0.0, %v473
    %v475 = vpop.f32.mrf.mxu0
    %476 = vdwg.mxu0
    %v477 = vmul.f32 %v38, %v38
    %479 = vrot.lane.b32.xlu0 %v477, 127
    %v480 = vpop.permute.xlu0 %479
    %v482 = vadd.f32 %v477, %v480
    %484 = vrot.lane.b32.xlu0 %v482, 4
    %v485 = vpop.permute.xlu0 %484
    %v487 = vmul.f32 %v38, %v485
    %v488 = vmul.f32 %v38, 9.81
    %490 = vrot.lane.b32.xlu0 %v488, 3
    %v491 = vpop.permute.xlu0 %490
    %v493 = vadd.f32 %v487, %v491
    %494 = vrot.lane.b32.xlu0 %v482, 2
    %v495 = vpop.permute.xlu0 %494
    %v497 = vsub.f32 %v493, %v495
    %v498 = vlaneseq
    %v499 = vand.u32 %v498, 127
    %vm500 = vcmp.eq.s32.totalorder %v499, 4
    %502 = vset.pattern.permute.xlu0 4
    %503 = vperm.xlu0 %502, %v497
    %v504 = vpop.permute.xlu0 %503
    %v506 = vsel %vm500, %v504, %v474
    %507 = vst [vmem:[#allocation7] sm:$0xff] %v506
    // Predicated region
    $region18: #{tpu_custom_call.1} parent=1 // pred_check
      _
    $region19: #{tpu_custom_call.1} parent=1 // pred_check_branch
      %509 = sbr.rel (0) target = $region21
    $region20: #{tpu_custom_call.1} parent=1 // pred_region
      %s511 = ssub.s32 128, 128
      %512 = vsyncadd [#allocation4], %s511
      %s514 = sshll.u32 [#allocation7], 4
      %s515 = int_to_ptr.vmem [resolvable:$true] %s514
      %517 = dma.vmem_to_hbm [thread:$0]  %s515, 128, %s2, [#allocation4]
    $region21: #{tpu_custom_call.1} parent=1 // pred_fallthru
      _
    // Predicated region
    $region22: #{tpu_custom_call.1} parent=1 // pred_check
      _
    $region23: #{tpu_custom_call.1} parent=1 // pred_check_branch
      %519 = sbr.rel (0) target = $region25
    $region24: #{tpu_custom_call.1} parent=1 // pred_region
      %520 = dma.done [#allocation4], 128
    $region25: #{tpu_custom_call.1} parent=1 // pred_fallthru
      _
    %521 = vsyncpa [#allocation3], 1
    %522 = vsyncpa [#allocation6], 1
    %523 = vsyncpa [#allocation4], 1

</llo_original>
